<compile_context>
chip_gen: v5e
topology: v5e:2x2
jax: 0.10.0
libtpu: 0.0.40
codegen_flags: <defaults>
</compile_context>

<pallas_src>
import math

import jax
import jax.numpy as jnp
from jax.experimental import pallas as pl
from jax.experimental.pallas import tpu as pltpu


def _mha_kernel_factory(B, S, E, H, Dh, inv_scale, with_mask):
    BS = B * S

    def kernel(*refs):
        if with_mask:
            x_ref, wqkv_ref, bqkv_ref, wo_ref, bo_ref, mask_ref, o_ref = refs
        else:
            x_ref, wqkv_ref, bqkv_ref, wo_ref, bo_ref, o_ref = refs
        f32 = jnp.float32

        # One fused QKV projection (block-diagonal weight) + one fused bias add:
        # (BS, 3E) @ (3E, 3E) -> [Q | K | V] laid out along 3E lanes.
        qkv = jnp.dot(x_ref[...], wqkv_ref[...],
                      preferred_element_type=f32) + bqkv_ref[...]

        wo = wo_ref[...]                                           # (E, E)

        if with_mask:
            # Hoisted once; shared by every head.
            neg = jnp.where(mask_ref[...] == 0.0,
                            jnp.float32(-1e9), jnp.float32(0.0))   # (B, S, S)

        # Output-projection accumulator kept as a value (no VMEM scratch,
        # no narrow masked stores).
        out = jnp.zeros((BS, E), f32)

        for h in range(H):                                         # tiny static loop
            q_h = qkv[:, 0 * E + h * Dh: 0 * E + (h + 1) * Dh].reshape(B, S, Dh)
            k_h = qkv[:, 1 * E + h * Dh: 1 * E + (h + 1) * Dh].reshape(B, S, Dh)
            v_h = qkv[:, 2 * E + h * Dh: 2 * E + (h + 1) * Dh].reshape(B, S, Dh)

            # Batched over B: one (B, S, S) score block per head.
            s = jnp.einsum('bqd,bkd->bqk', q_h, k_h,
                           preferred_element_type=f32) * inv_scale
            if with_mask:
                s = s + neg
            s = s - jnp.max(s, axis=-1, keepdims=True)
            p = jnp.exp(s)
            p = p * pl.reciprocal(jnp.sum(p, axis=-1, keepdims=True), approx=True)
            # TODO(synk): training-mode dropout on p (pltpu.prng_*) omitted;
            # eval / drop_rate=0 path is identity.

            ctx = jnp.einsum('bqk,bkd->bqd', p, v_h,
                             preferred_element_type=f32)           # (B, S, Dh)

            # Fold W_o into the head loop: out += ctx_h @ Wo[h*Dh:(h+1)*Dh, :].
            out = out + jnp.dot(ctx.reshape(BS, Dh),
                                wo[h * Dh:(h + 1) * Dh, :],
                                preferred_element_type=f32)

        o_ref[...] = (out + bo_ref[...]).astype(o_ref.dtype)

    return kernel


def multi_head_attention(query, key, value,
                         wq, bq, wk, bk, wv, bv, wo, bo,
                         *, n_heads, mask=None):
    """query/key/value: (B, S, E); weights (E, E); biases (E,); mask (B,S,S) or None."""
    B, S, E = query.shape
    assert E % n_heads == 0, "emb_dim must be divisible by n_heads"
    H = n_heads
    Dh = E // H
    inv_scale = 1.0 / math.sqrt(Dh)
    BS = B * S

    # Collapse (B, S) into one row axis and fuse Q|K|V inputs along lanes.
    x_cat = jnp.concatenate([query.reshape(BS, E),
                             key.reshape(BS, E),
                             value.reshape(BS, E)], axis=-1)        # (BS, 3E)

    # Block-diagonal fused QKV weight -> one MXU push, 3E-lane-wide output.
    # TODO(synk): for self-attention (q is k is v) at production E, use the
    # dense (E, 3E) slab instead to avoid the zero-block FLOPs/DMA bytes.
    w_qkv = jnp.zeros((3 * E, 3 * E), wq.dtype)
    w_qkv = w_qkv.at[0:E, 0:E].set(wq)
    w_qkv = w_qkv.at[E:2 * E, E:2 * E].set(wk)
    w_qkv = w_qkv.at[2 * E:3 * E, 2 * E:3 * E].set(wv)
    b_qkv = jnp.concatenate([bq, bk, bv]).reshape(1, 3 * E)
    bo2 = bo.reshape(1, E)

    with_mask = mask is not None
    kernel = _mha_kernel_factory(B, S, E, H, Dh, inv_scale, with_mask)

    in_specs = [
        pl.BlockSpec((BS, 3 * E), lambda i: (0, 0)),      # [xq | xk | xv]
        pl.BlockSpec((3 * E, 3 * E), lambda i: (0, 0)),   # block-diag Wq/Wk/Wv
        pl.BlockSpec((1, 3 * E), lambda i: (0, 0)),       # [bq | bk | bv]
        pl.BlockSpec((E, E), lambda i: (0, 0)),           # W_o
        pl.BlockSpec((1, E), lambda i: (0, 0)),           # b_o
    ]
    args = [x_cat, w_qkv, b_qkv, wo, bo2]
    if with_mask:
        # TODO(synk): at production S pass int8/bool or build causal masks
        # in-kernel with broadcasted_iota instead of a dense f32 (B,S,S).
        mask_f = jnp.broadcast_to(mask.astype(jnp.float32), (B, S, S))
        in_specs.append(pl.BlockSpec((B, S, S), lambda i: (0, 0, 0)))
        args.append(mask_f)

    out2d = pl.pallas_call(
        kernel,
        out_shape=jax.ShapeDtypeStruct((BS, E), query.dtype),
        grid=(1,),  # single fused program: every operand VMEM-resident
        in_specs=in_specs,
        out_specs=pl.BlockSpec((BS, E), lambda i: (0, 0)),
        compiler_params=pltpu.CompilerParams(dimension_semantics=("arbitrary",)),
    )(*args)

    return out2d.reshape(B, S, E)


def mha_reference(query, key, value, wq, bq, wk, bk, wv, bv, wo, bo,
                  *, n_heads, mask=None):
    """Plain-JAX reference of the intended PyTorch forward (default precision)."""
    B, S, E = query.shape
    Dh = E // n_heads
    Q = jnp.dot(query, wq) + bq
    K = jnp.dot(key, wk) + bk
    V = jnp.dot(value, wv) + bv

    def split(x):
        return x.reshape(B, S, n_heads, Dh).transpose(0, 2, 1, 3)  # (B,H,S,Dh)

    Qh, Kh, Vh = split(Q), split(K), split(V)
    scores = jnp.einsum('bhqd,bhkd->bhqk', Qh, Kh) / math.sqrt(Dh)
    if mask is not None:
        scores = jnp.where(mask[:, None, :, :] == 0, -1e9, scores)
    w = jax.nn.softmax(scores, axis=-1)
    ctx = jnp.einsum('bhqk,bhkd->bhqd', w, Vh)
    ctx = ctx.transpose(0, 2, 1, 3).reshape(B, S, E)
    return jnp.dot(ctx, wo) + bo


if __name__ == "__main__":
    # config equivalent: {'emb_dim': 32, 'n_heads': 4, 'drop_rate': 0.0, 'qkv_bias': True}
    emb_dim, n_heads = 32, 4
    B, S = 2, 8
    dt = jnp.float32

    keys = jax.random.split(jax.random.PRNGKey(0), 11)
    q = jax.random.normal(keys[0], (B, S, emb_dim), dt)
    k = jax.random.normal(keys[1], (B, S, emb_dim), dt)
    v = jax.random.normal(keys[2], (B, S, emb_dim), dt)
    wscale = 1.0 / math.sqrt(emb_dim)
    wq = jax.random.normal(keys[3], (emb_dim, emb_dim), dt) * wscale
    wk = jax.random.normal(keys[4], (emb_dim, emb_dim), dt) * wscale
    wv = jax.random.normal(keys[5], (emb_dim, emb_dim), dt) * wscale
    wo = jax.random.normal(keys[6], (emb_dim, emb_dim), dt) * wscale
    bq = jax.random.normal(keys[7], (emb_dim,), dt) * 0.1
    bk = jax.random.normal(keys[8], (emb_dim,), dt) * 0.1
    bv = jax.random.normal(keys[9], (emb_dim,), dt) * 0.1
    bo = jax.random.normal(keys[10], (emb_dim,), dt) * 0.1

    tol = dict(atol=1e-2, rtol=1e-2)  # default MXU precision + approx reciprocal

    # 1) unmasked (mask=None): no mask operand, no mask math in-kernel.
    out = multi_head_attention(q, k, v, wq, bq, wk, bk, wv, bv, wo, bo,
                               n_heads=n_heads, mask=None)
    out = jax.block_until_ready(out)
    ref = mha_reference(q, k, v, wq, bq, wk, bk, wv, bv, wo, bo,
                        n_heads=n_heads, mask=None)
    assert out.shape == (B, S, emb_dim)
    assert jnp.allclose(out, ref, **tol), (
        f"unmasked mismatch, max abs diff {jnp.max(jnp.abs(out - ref))}")

    # 2) causal mask path (exercises masked_fill semantics).
    causal = jnp.broadcast_to(jnp.tril(jnp.ones((S, S), dt))[None], (B, S, S))
    out_m = multi_head_attention(q, k, v, wq, bq, wk, bk, wv, bv, wo, bo,
                                 n_heads=n_heads, mask=causal)
    out_m = jax.block_until_ready(out_m)
    ref_m = mha_reference(q, k, v, wq, bq, wk, bk, wv, bv, wo, bo,
                          n_heads=n_heads, mask=causal)
    assert jnp.allclose(out_m, ref_m, **tol), (
        f"masked mismatch, max abs diff {jnp.max(jnp.abs(out_m - ref_m))}")

    print("KERNEL_OK")
</pallas_src>

<mosaic_0001>
module attributes {stable_mosaic.version = 11 : i64} {
  func.func @kernel(%arg0: i32, %arg1: memref<16x96xf32, #tpu.memory_space<vmem>>, %arg2: memref<96x96xf32, #tpu.memory_space<vmem>>, %arg3: memref<1x96xf32, #tpu.memory_space<vmem>>, %arg4: memref<32x32xf32, #tpu.memory_space<vmem>>, %arg5: memref<1x32xf32, #tpu.memory_space<vmem>>, %arg6: memref<16x32xf32, #tpu.memory_space<vmem>>) attributes {dimension_semantics = [#tpu.dimension_semantics<arbitrary>], iteration_bounds = array<i64: 1>, scalar_prefetch = 0 : i64, scratch_operands = 0 : i64, tpu.core_type = #tpu.core_type<tc>, window_params = [{pipeline_mode = #tpu.pipeline_mode<synchronous>, transform_indices = @transform_0, window_bounds = array<i64: 16, 96>}, {pipeline_mode = #tpu.pipeline_mode<synchronous>, transform_indices = @transform_1, window_bounds = array<i64: 96, 96>}, {pipeline_mode = #tpu.pipeline_mode<synchronous>, transform_indices = @transform_2, window_bounds = array<i64: 1, 96>}, {pipeline_mode = #tpu.pipeline_mode<synchronous>, transform_indices = @transform_3, window_bounds = array<i64: 32, 32>}, {pipeline_mode = #tpu.pipeline_mode<synchronous>, transform_indices = @transform_4, window_bounds = array<i64: 1, 32>}, {pipeline_mode = #tpu.pipeline_mode<synchronous>, transform_indices = @transform_5, window_bounds = array<i64: 16, 32>}]} {
    %c0 = arith.constant 0 : index
    %c0_0 = arith.constant 0 : index
    %0 = vector.load %arg1[%c0, %c0_0] : memref<16x96xf32, #tpu.memory_space<vmem>>, vector<16x96xf32>
    %c0_1 = arith.constant 0 : index
    %c0_2 = arith.constant 0 : index
    %1 = vector.load %arg2[%c0_1, %c0_2] : memref<96x96xf32, #tpu.memory_space<vmem>>, vector<96x96xf32>
    %cst = arith.constant dense<0.000000e+00> : vector<16x96xf32>
    %2 = tpu.matmul %0, %1, %cst {dimension_numbers = #tpu.dot_dimension_numbers<[1], [0], [0], [1], [0, 0, 1, 1], [], []>} : vector<16x96xf32>, vector<96x96xf32>, vector<16x96xf32> -> vector<16x96xf32>
    %c0_3 = arith.constant 0 : index
    %c0_4 = arith.constant 0 : index
    %3 = vector.load %arg3[%c0_3, %c0_4] : memref<1x96xf32, #tpu.memory_space<vmem>>, vector<1x96xf32>
    %4 = vector.broadcast %3 : vector<1x96xf32> to vector<16x96xf32>
    %5 = arith.addf %2, %4 : vector<16x96xf32>
    %c0_5 = arith.constant 0 : index
    %c0_6 = arith.constant 0 : index
    %6 = vector.load %arg4[%c0_5, %c0_6] : memref<32x32xf32, #tpu.memory_space<vmem>>, vector<32x32xf32>
    %cst_7 = arith.constant 0.000000e+00 : f32
    %7 = vector.broadcast %cst_7 : f32 to vector<16x32xf32>
    %8 = vector.extract_strided_slice %5 {offsets = [0, 0], sizes = [16, 8], strides = [1, 1]} : vector<16x96xf32> to vector<16x8xf32>
    %9 = vector.shape_cast %8 : vector<16x8xf32> to vector<2x8x8xf32>
    %10 = vector.extract_strided_slice %5 {offsets = [0, 32], sizes = [16, 8], strides = [1, 1]} : vector<16x96xf32> to vector<16x8xf32>
    %11 = vector.shape_cast %10 : vector<16x8xf32> to vector<2x8x8xf32>
    %12 = vector.extract_strided_slice %5 {offsets = [0, 64], sizes = [16, 8], strides = [1, 1]} : vector<16x96xf32> to vector<16x8xf32>
    %13 = vector.shape_cast %12 : vector<16x8xf32> to vector<2x8x8xf32>
    "tpu.trace_start"() <{level = 10 : i32, message = "bqd,bkd->bqk"}> : () -> ()
    %cst_8 = arith.constant dense<0.000000e+00> : vector<2x8x8xf32>
    %14 = tpu.matmul %9, %11, %cst_8 {dimension_numbers = #tpu.dot_dimension_numbers<[2], [2], [1], [1], [0, 0, 0, 1, 1, 1], [0], [0]>} : vector<2x8x8xf32>, vector<2x8x8xf32>, vector<2x8x8xf32> -> vector<2x8x8xf32>
    "tpu.trace_stop"() : () -> ()
    %cst_9 = arith.constant 0.353553385 : f32
    %15 = vector.broadcast %cst_9 : f32 to vector<2x8x8xf32>
    %16 = arith.mulf %14, %15 : vector<2x8x8xf32>
    %cst_10 = arith.constant dense<0xFF800000> : vector<2x8xf32>
    %17 = vector.multi_reduction <maximumf>, %16, %cst_10 [2] : vector<2x8x8xf32> to vector<2x8xf32>
    %18 = vector.shape_cast %17 : vector<2x8xf32> to vector<2x8x1xf32>
    %19 = vector.broadcast %18 : vector<2x8x1xf32> to vector<2x8x8xf32>
    %20 = arith.subf %16, %19 : vector<2x8x8xf32>
    %21 = math.exp %20 : vector<2x8x8xf32>
    %cst_11 = arith.constant dense<0.000000e+00> : vector<2x8xf32>
    %22 = vector.multi_reduction <add>, %21, %cst_11 [2] : vector<2x8x8xf32> to vector<2x8xf32>
    %23 = vector.shape_cast %22 : vector<2x8xf32> to vector<2x8x1xf32>
    %24 = tpu.reciprocal %23 {approx = true} : vector<2x8x1xf32> -> vector<2x8x1xf32>
    %25 = vector.broadcast %24 : vector<2x8x1xf32> to vector<2x8x8xf32>
    %26 = arith.mulf %21, %25 : vector<2x8x8xf32>
    "tpu.trace_start"() <{level = 10 : i32, message = "bqk,bkd->bqd"}> : () -> ()
    %cst_12 = arith.constant dense<0.000000e+00> : vector<2x8x8xf32>
    %27 = tpu.matmul %26, %13, %cst_12 {dimension_numbers = #tpu.dot_dimension_numbers<[2], [1], [1], [2], [0, 0, 0, 1, 1, 2], [0], [0]>} : vector<2x8x8xf32>, vector<2x8x8xf32>, vector<2x8x8xf32> -> vector<2x8x8xf32>
    "tpu.trace_stop"() : () -> ()
    %28 = vector.shape_cast %27 : vector<2x8x8xf32> to vector<16x8xf32>
    %29 = vector.extract_strided_slice %6 {offsets = [0, 0], sizes = [8, 32], strides = [1, 1]} : vector<32x32xf32> to vector<8x32xf32>
    %cst_13 = arith.constant dense<0.000000e+00> : vector<16x32xf32>
    %30 = tpu.matmul %28, %29, %cst_13 {dimension_numbers = #tpu.dot_dimension_numbers<[1], [0], [0], [1], [0, 0, 1, 1], [], []>} : vector<16x8xf32>, vector<8x32xf32>, vector<16x32xf32> -> vector<16x32xf32>
    %31 = arith.addf %7, %30 : vector<16x32xf32>
    %32 = vector.extract_strided_slice %5 {offsets = [0, 8], sizes = [16, 8], strides = [1, 1]} : vector<16x96xf32> to vector<16x8xf32>
    %33 = vector.shape_cast %32 : vector<16x8xf32> to vector<2x8x8xf32>
    %34 = vector.extract_strided_slice %5 {offsets = [0, 40], sizes = [16, 8], strides = [1, 1]} : vector<16x96xf32> to vector<16x8xf32>
    %35 = vector.shape_cast %34 : vector<16x8xf32> to vector<2x8x8xf32>
    %36 = vector.extract_strided_slice %5 {offsets = [0, 72], sizes = [16, 8], strides = [1, 1]} : vector<16x96xf32> to vector<16x8xf32>
    %37 = vector.shape_cast %36 : vector<16x8xf32> to vector<2x8x8xf32>
    "tpu.trace_start"() <{level = 10 : i32, message = "bqd,bkd->bqk"}> : () -> ()
    %cst_14 = arith.constant dense<0.000000e+00> : vector<2x8x8xf32>
    %38 = tpu.matmul %33, %35, %cst_14 {dimension_numbers = #tpu.dot_dimension_numbers<[2], [2], [1], [1], [0, 0, 0, 1, 1, 1], [0], [0]>} : vector<2x8x8xf32>, vector<2x8x8xf32>, vector<2x8x8xf32> -> vector<2x8x8xf32>
    "tpu.trace_stop"() : () -> ()
    %cst_15 = arith.constant 0.353553385 : f32
    %39 = vector.broadcast %cst_15 : f32 to vector<2x8x8xf32>
    %40 = arith.mulf %38, %39 : vector<2x8x8xf32>
    %cst_16 = arith.constant dense<0xFF800000> : vector<2x8xf32>
    %41 = vector.multi_reduction <maximumf>, %40, %cst_16 [2] : vector<2x8x8xf32> to vector<2x8xf32>
    %42 = vector.shape_cast %41 : vector<2x8xf32> to vector<2x8x1xf32>
    %43 = vector.broadcast %42 : vector<2x8x1xf32> to vector<2x8x8xf32>
    %44 = arith.subf %40, %43 : vector<2x8x8xf32>
    %45 = math.exp %44 : vector<2x8x8xf32>
    %cst_17 = arith.constant dense<0.000000e+00> : vector<2x8xf32>
    %46 = vector.multi_reduction <add>, %45, %cst_17 [2] : vector<2x8x8xf32> to vector<2x8xf32>
    %47 = vector.shape_cast %46 : vector<2x8xf32> to vector<2x8x1xf32>
    %48 = tpu.reciprocal %47 {approx = true} : vector<2x8x1xf32> -> vector<2x8x1xf32>
    %49 = vector.broadcast %48 : vector<2x8x1xf32> to vector<2x8x8xf32>
    %50 = arith.mulf %45, %49 : vector<2x8x8xf32>
    "tpu.trace_start"() <{level = 10 : i32, message = "bqk,bkd->bqd"}> : () -> ()
    %cst_18 = arith.constant dense<0.000000e+00> : vector<2x8x8xf32>
    %51 = tpu.matmul %50, %37, %cst_18 {dimension_numbers = #tpu.dot_dimension_numbers<[2], [1], [1], [2], [0, 0, 0, 1, 1, 2], [0], [0]>} : vector<2x8x8xf32>, vector<2x8x8xf32>, vector<2x8x8xf32> -> vector<2x8x8xf32>
    "tpu.trace_stop"() : () -> ()
    %52 = vector.shape_cast %51 : vector<2x8x8xf32> to vector<16x8xf32>
    %53 = vector.extract_strided_slice %6 {offsets = [8, 0], sizes = [8, 32], strides = [1, 1]} : vector<32x32xf32> to vector<8x32xf32>
    %cst_19 = arith.constant dense<0.000000e+00> : vector<16x32xf32>
    %54 = tpu.matmul %52, %53, %cst_19 {dimension_numbers = #tpu.dot_dimension_numbers<[1], [0], [0], [1], [0, 0, 1, 1], [], []>} : vector<16x8xf32>, vector<8x32xf32>, vector<16x32xf32> -> vector<16x32xf32>
    %55 = arith.addf %31, %54 : vector<16x32xf32>
    %56 = vector.extract_strided_slice %5 {offsets = [0, 16], sizes = [16, 8], strides = [1, 1]} : vector<16x96xf32> to vector<16x8xf32>
    %57 = vector.shape_cast %56 : vector<16x8xf32> to vector<2x8x8xf32>
    %58 = vector.extract_strided_slice %5 {offsets = [0, 48], sizes = [16, 8], strides = [1, 1]} : vector<16x96xf32> to vector<16x8xf32>
    %59 = vector.shape_cast %58 : vector<16x8xf32> to vector<2x8x8xf32>
    %60 = vector.extract_strided_slice %5 {offsets = [0, 80], sizes = [16, 8], strides = [1, 1]} : vector<16x96xf32> to vector<16x8xf32>
    %61 = vector.shape_cast %60 : vector<16x8xf32> to vector<2x8x8xf32>
    "tpu.trace_start"() <{level = 10 : i32, message = "bqd,bkd->bqk"}> : () -> ()
    %cst_20 = arith.constant dense<0.000000e+00> : vector<2x8x8xf32>
    %62 = tpu.matmul %57, %59, %cst_20 {dimension_numbers = #tpu.dot_dimension_numbers<[2], [2], [1], [1], [0, 0, 0, 1, 1, 1], [0], [0]>} : vector<2x8x8xf32>, vector<2x8x8xf32>, vector<2x8x8xf32> -> vector<2x8x8xf32>
    "tpu.trace_stop"() : () -> ()
    %cst_21 = arith.constant 0.353553385 : f32
    %63 = vector.broadcast %cst_21 : f32 to vector<2x8x8xf32>
    %64 = arith.mulf %62, %63 : vector<2x8x8xf32>
    %cst_22 = arith.constant dense<0xFF800000> : vector<2x8xf32>
    %65 = vector.multi_reduction <maximumf>, %64, %cst_22 [2] : vector<2x8x8xf32> to vector<2x8xf32>
    %66 = vector.shape_cast %65 : vector<2x8xf32> to vector<2x8x1xf32>
    %67 = vector.broadcast %66 : vector<2x8x1xf32> to vector<2x8x8xf32>
    %68 = arith.subf %64, %67 : vector<2x8x8xf32>
    %69 = math.exp %68 : vector<2x8x8xf32>
    %cst_23 = arith.constant dense<0.000000e+00> : vector<2x8xf32>
    %70 = vector.multi_reduction <add>, %69, %cst_23 [2] : vector<2x8x8xf32> to vector<2x8xf32>
    %71 = vector.shape_cast %70 : vector<2x8xf32> to vector<2x8x1xf32>
    %72 = tpu.reciprocal %71 {approx = true} : vector<2x8x1xf32> -> vector<2x8x1xf32>
    %73 = vector.broadcast %72 : vector<2x8x1xf32> to vector<2x8x8xf32>
    %74 = arith.mulf %69, %73 : vector<2x8x8xf32>
    "tpu.trace_start"() <{level = 10 : i32, message = "bqk,bkd->bqd"}> : () -> ()
    %cst_24 = arith.constant dense<0.000000e+00> : vector<2x8x8xf32>
    %75 = tpu.matmul %74, %61, %cst_24 {dimension_numbers = #tpu.dot_dimension_numbers<[2], [1], [1], [2], [0, 0, 0, 1, 1, 2], [0], [0]>} : vector<2x8x8xf32>, vector<2x8x8xf32>, vector<2x8x8xf32> -> vector<2x8x8xf32>
    "tpu.trace_stop"() : () -> ()
    %76 = vector.shape_cast %75 : vector<2x8x8xf32> to vector<16x8xf32>
    %77 = vector.extract_strided_slice %6 {offsets = [16, 0], sizes = [8, 32], strides = [1, 1]} : vector<32x32xf32> to vector<8x32xf32>
    %cst_25 = arith.constant dense<0.000000e+00> : vector<16x32xf32>
    %78 = tpu.matmul %76, %77, %cst_25 {dimension_numbers = #tpu.dot_dimension_numbers<[1], [0], [0], [1], [0, 0, 1, 1], [], []>} : vector<16x8xf32>, vector<8x32xf32>, vector<16x32xf32> -> vector<16x32xf32>
    %79 = arith.addf %55, %78 : vector<16x32xf32>
    %80 = vector.extract_strided_slice %5 {offsets = [0, 24], sizes = [16, 8], strides = [1, 1]} : vector<16x96xf32> to vector<16x8xf32>
    %81 = vector.shape_cast %80 : vector<16x8xf32> to vector<2x8x8xf32>
    %82 = vector.extract_strided_slice %5 {offsets = [0, 56], sizes = [16, 8], strides = [1, 1]} : vector<16x96xf32> to vector<16x8xf32>
    %83 = vector.shape_cast %82 : vector<16x8xf32> to vector<2x8x8xf32>
    %84 = vector.extract_strided_slice %5 {offsets = [0, 88], sizes = [16, 8], strides = [1, 1]} : vector<16x96xf32> to vector<16x8xf32>
    %85 = vector.shape_cast %84 : vector<16x8xf32> to vector<2x8x8xf32>
    "tpu.trace_start"() <{level = 10 : i32, message = "bqd,bkd->bqk"}> : () -> ()
    %cst_26 = arith.constant dense<0.000000e+00> : vector<2x8x8xf32>
    %86 = tpu.matmul %81, %83, %cst_26 {dimension_numbers = #tpu.dot_dimension_numbers<[2], [2], [1], [1], [0, 0, 0, 1, 1, 1], [0], [0]>} : vector<2x8x8xf32>, vector<2x8x8xf32>, vector<2x8x8xf32> -> vector<2x8x8xf32>
    "tpu.trace_stop"() : () -> ()
    %cst_27 = arith.constant 0.353553385 : f32
    %87 = vector.broadcast %cst_27 : f32 to vector<2x8x8xf32>
    %88 = arith.mulf %86, %87 : vector<2x8x8xf32>
    %cst_28 = arith.constant dense<0xFF800000> : vector<2x8xf32>
    %89 = vector.multi_reduction <maximumf>, %88, %cst_28 [2] : vector<2x8x8xf32> to vector<2x8xf32>
    %90 = vector.shape_cast %89 : vector<2x8xf32> to vector<2x8x1xf32>
    %91 = vector.broadcast %90 : vector<2x8x1xf32> to vector<2x8x8xf32>
    %92 = arith.subf %88, %91 : vector<2x8x8xf32>
    %93 = math.exp %92 : vector<2x8x8xf32>
    %cst_29 = arith.constant dense<0.000000e+00> : vector<2x8xf32>
    %94 = vector.multi_reduction <add>, %93, %cst_29 [2] : vector<2x8x8xf32> to vector<2x8xf32>
    %95 = vector.shape_cast %94 : vector<2x8xf32> to vector<2x8x1xf32>
    %96 = tpu.reciprocal %95 {approx = true} : vector<2x8x1xf32> -> vector<2x8x1xf32>
    %97 = vector.broadcast %96 : vector<2x8x1xf32> to vector<2x8x8xf32>
    %98 = arith.mulf %93, %97 : vector<2x8x8xf32>
    "tpu.trace_start"() <{level = 10 : i32, message = "bqk,bkd->bqd"}> : () -> ()
    %cst_30 = arith.constant dense<0.000000e+00> : vector<2x8x8xf32>
    %99 = tpu.matmul %98, %85, %cst_30 {dimension_numbers = #tpu.dot_dimension_numbers<[2], [1], [1], [2], [0, 0, 0, 1, 1, 2], [0], [0]>} : vector<2x8x8xf32>, vector<2x8x8xf32>, vector<2x8x8xf32> -> vector<2x8x8xf32>
    "tpu.trace_stop"() : () -> ()
    %100 = vector.shape_cast %99 : vector<2x8x8xf32> to vector<16x8xf32>
    %101 = vector.extract_strided_slice %6 {offsets = [24, 0], sizes = [8, 32], strides = [1, 1]} : vector<32x32xf32> to vector<8x32xf32>
    %cst_31 = arith.constant dense<0.000000e+00> : vector<16x32xf32>
    %102 = tpu.matmul %100, %101, %cst_31 {dimension_numbers = #tpu.dot_dimension_numbers<[1], [0], [0], [1], [0, 0, 1, 1], [], []>} : vector<16x8xf32>, vector<8x32xf32>, vector<16x32xf32> -> vector<16x32xf32>
    %103 = arith.addf %79, %102 : vector<16x32xf32>
    %c0_32 = arith.constant 0 : index
    %c0_33 = arith.constant 0 : index
    %104 = vector.load %arg5[%c0_32, %c0_33] : memref<1x32xf32, #tpu.memory_space<vmem>>, vector<1x32xf32>
    %105 = vector.broadcast %104 : vector<1x32xf32> to vector<16x32xf32>
    %106 = arith.addf %103, %105 : vector<16x32xf32>
    %c0_34 = arith.constant 0 : index
    %c0_35 = arith.constant 0 : index
    %107 = vector.load %arg6[%c0_34, %c0_35] : memref<16x32xf32, #tpu.memory_space<vmem>>, vector<16x32xf32>
    tpu.vector_store %arg6[%c0_34, %c0_35], %106 {strides = array<i32>} : memref<16x32xf32, #tpu.memory_space<vmem>>, vector<16x32xf32>,
    return
  }
  func.func @transform_0(%arg0: i32) -> (i32, i32) {
    %c0_i32 = arith.constant 0 : i32
    %c0_i32_0 = arith.constant 0 : i32
    %c0_i32_1 = arith.constant 0 : i32
    return %c0_i32, %c0_i32_0 : i32, i32
  }
  func.func @transform_1(%arg0: i32) -> (i32, i32) {
    %c0_i32 = arith.constant 0 : i32
    %c0_i32_0 = arith.constant 0 : i32
    %c0_i32_1 = arith.constant 0 : i32
    return %c0_i32, %c0_i32_0 : i32, i32
  }
  func.func @transform_2(%arg0: i32) -> (i32, i32) {
    %c0_i32 = arith.constant 0 : i32
    %c0_i32_0 = arith.constant 0 : i32
    %c0_i32_1 = arith.constant 0 : i32
    return %c0_i32, %c0_i32_0 : i32, i32
  }
  func.func @transform_3(%arg0: i32) -> (i32, i32) {
    %c0_i32 = arith.constant 0 : i32
    %c0_i32_0 = arith.constant 0 : i32
    %c0_i32_1 = arith.constant 0 : i32
    return %c0_i32, %c0_i32_0 : i32, i32
  }
  func.func @transform_4(%arg0: i32) -> (i32, i32) {
    %c0_i32 = arith.constant 0 : i32
    %c0_i32_0 = arith.constant 0 : i32
    %c0_i32_1 = arith.constant 0 : i32
    return %c0_i32, %c0_i32_0 : i32, i32
  }
  func.func @transform_5(%arg0: i32) -> (i32, i32) {
    %c0_i32 = arith.constant 0 : i32
    %c0_i32_0 = arith.constant 0 : i32
    %c0_i32_1 = arith.constant 0 : i32
    return %c0_i32, %c0_i32_0 : i32, i32
  }
}

</mosaic_0001>

<llo_original>
// kernel: tpu_custom_call.1
$region0: #{tpu_custom_call.1}
  #allocation0 [shape = 'u32[]', space=smem, size = 0x4, offset = 0x4, fixed_abs, tag = 'smem constant byte address 0x4 - core index']
  #allocation1 [shape = 'u32[72,128]{1,0:T(1,128)}', space=vmem, size = 0x9000, scoped, tag = 'internal scratch']
  %s0 = inlined_call_operand.hbm [shape: f32[16,96], index: 0, kind: input, shape index: {}]
  %s1 = inlined_call_operand.hbm [shape: f32[96,96], index: 1, kind: input, shape index: {}]
  %s2 = inlined_call_operand.vmem [shape: f32[1,96], index: 2, kind: input, shape index: {}]
  %s3 = inlined_call_operand.hbm [shape: f32[32,32], index: 3, kind: input, shape index: {}]
  %s4 = inlined_call_operand.vmem [shape: f32[1,32], index: 4, kind: input, shape index: {}]
  %s5 = inlined_call_operand.hbm [shape: f32[16,32], index: 5, kind: output, shape index: {}]
  %s6 = sld [smem:[#allocation0]]
  $region42: #{tpu_custom_call.1} parent=0
    _
  %s8 = ssub.s32 1, %s6
  %s9 = scalar_select 0, %s8, %s6
  $region1: #{tpu_custom_call.1} parent=0
    #allocation2 [shape = 'u8[8192]{0}', space=vmem, size = 0x2000, scoped, tag = 'input window, operand 0, single buffered']
    #allocation3 [shape = 's32[1]{0}', space=sflag, size = 0x4, scoped, tag = 'scoped memory for tpu_custom_call.1']
    #allocation4 [shape = 's32[1]{0}', space=sflag, size = 0x4, scoped, tag = 'scoped memory for tpu_custom_call.1']
    #allocation5 [shape = 'u8[49152]{0}', space=vmem, size = 0xc000, scoped, tag = 'input window, operand 1, single buffered']
    #allocation6 [shape = 's32[1]{0}', space=sflag, size = 0x4, scoped, tag = 'scoped memory for tpu_custom_call.1']
    #allocation7 [shape = 'u8[16384]{0}', space=vmem, size = 0x4000, scoped, tag = 'input window, operand 3, single buffered']
    #allocation8 [shape = 'u8[8192]{0}', space=vmem, size = 0x2000, scoped, tag = 'output window, operand 0, single buffered']
    %10 = vsyncpa [#allocation3], 0
    %11 = vsyncpa [#allocation6], 0
    %12 = vsyncpa [#allocation4], 0
    // Predicated region
    $region2: #{tpu_custom_call.1} parent=1 // pred_check
      _
    $region3: #{tpu_custom_call.1} parent=1 // pred_check_branch
      %14 = sbr.rel (0) target = $region5
    $region4: #{tpu_custom_call.1} parent=1 // pred_region
      %16 = vsyncadd [#allocation3], 0
      %s17 = sshll.u32 %s0, 4
      %s18 = int_to_ptr.hbm [resolvable:$true] %s17
      %s19 = sshll.u32 [#allocation2], 4
      %s20 = int_to_ptr.vmem [resolvable:$true] %s19
      %25 = dma.hbm_to_vmem [thread:$0]  %s18, 256, %s20, [#allocation3], 128, 128, 8
    $region5: #{tpu_custom_call.1} parent=1 // pred_fallthru
      _
    // Predicated region
    $region6: #{tpu_custom_call.1} parent=1 // pred_check
      _
    $region7: #{tpu_custom_call.1} parent=1 // pred_check_branch
      %27 = sbr.rel (0) target = $region9
    $region8: #{tpu_custom_call.1} parent=1 // pred_region
      %29 = vsyncadd [#allocation6], 0
      %s30 = sshll.u32 %s1, 4
      %s31 = int_to_ptr.hbm [resolvable:$true] %s30
      %s32 = sshll.u32 [#allocation5], 4
      %s33 = int_to_ptr.vmem [resolvable:$true] %s32
      %38 = dma.hbm_to_vmem [thread:$0]  %s31, 1536, %s33, [#allocation6], 128, 128, 8
    $region9: #{tpu_custom_call.1} parent=1 // pred_fallthru
      _
    // Predicated region
    $region10: #{tpu_custom_call.1} parent=1 // pred_check
      _
    $region11: #{tpu_custom_call.1} parent=1 // pred_check_branch
      %40 = sbr.rel (0) target = $region13
    $region12: #{tpu_custom_call.1} parent=1 // pred_region
      _
    $region13: #{tpu_custom_call.1} parent=1 // pred_fallthru
      _
    // Predicated region
    $region14: #{tpu_custom_call.1} parent=1 // pred_check
      _
    $region15: #{tpu_custom_call.1} parent=1 // pred_check_branch
      %42 = sbr.rel (0) target = $region17
    $region16: #{tpu_custom_call.1} parent=1 // pred_region
      %44 = vsyncadd [#allocation6], 0
      %s45 = sshll.u32 %s3, 4
      %s46 = int_to_ptr.hbm [resolvable:$true] %s45
      %s47 = sshll.u32 [#allocation7], 4
      %s48 = int_to_ptr.vmem [resolvable:$true] %s47
      %53 = dma.hbm_to_vmem [thread:$0]  %s46, 512, %s48, [#allocation6], 128, 128, 8
    $region17: #{tpu_custom_call.1} parent=1 // pred_fallthru
      _
    // Predicated region
    $region18: #{tpu_custom_call.1} parent=1 // pred_check
      _
    $region19: #{tpu_custom_call.1} parent=1 // pred_check_branch
      %55 = sbr.rel (0) target = $region21
    $region20: #{tpu_custom_call.1} parent=1 // pred_region
      _
    $region21: #{tpu_custom_call.1} parent=1 // pred_fallthru
      _
    // Predicated region
    $region22: #{tpu_custom_call.1} parent=1 // pred_check
      _
    $region23: #{tpu_custom_call.1} parent=1 // pred_check_branch
      %57 = sbr.rel (0) target = $region25
    $region24: #{tpu_custom_call.1} parent=1 // pred_region
      %59 = dma.done [#allocation3], 256
    $region25: #{tpu_custom_call.1} parent=1 // pred_fallthru
      _
    // Predicated region
    $region26: #{tpu_custom_call.1} parent=1 // pred_check
      _
    $region27: #{tpu_custom_call.1} parent=1 // pred_check_branch
      %61 = sbr.rel (0) target = $region29
    $region28: #{tpu_custom_call.1} parent=1 // pred_region
      %63 = dma.done [#allocation6], 1536
    $region29: #{tpu_custom_call.1} parent=1 // pred_fallthru
      _
    // Predicated region
    $region30: #{tpu_custom_call.1} parent=1 // pred_check
      _
    $region31: #{tpu_custom_call.1} parent=1 // pred_check_branch
      %65 = sbr.rel (0) target = $region33
    $region32: #{tpu_custom_call.1} parent=1 // pred_region
      %67 = dma.done [#allocation6], 512
    $region33: #{tpu_custom_call.1} parent=1 // pred_fallthru
      _
    %v68 = vld [vmem:[#allocation2] sm:$0xff]
    %v69 = vld [vmem:[#allocation2 + $0x8] sm:$0xff]
    %v70 = vld [vmem:[#allocation5] sm:$0xff]
    %v71 = vld [vmem:[#allocation5 + $0x8] sm:$0xff]
    %v72 = vld [vmem:[#allocation5 + $0x10] sm:$0xff]
    %v73 = vld [vmem:[#allocation5 + $0x18] sm:$0xff]
    %v74 = vld [vmem:[#allocation5 + $0x20] sm:$0xff]
    %v75 = vld [vmem:[#allocation5 + $0x28] sm:$0xff]
    %v76 = vld [vmem:[#allocation5 + $0x30] sm:$0xff]
    %v77 = vld [vmem:[#allocation5 + $0x38] sm:$0xff]
    %v78 = vld [vmem:[#allocation5 + $0x40] sm:$0xff]
    %v79 = vld [vmem:[#allocation5 + $0x48] sm:$0xff]
    %v80 = vld [vmem:[#allocation5 + $0x50] sm:$0xff]
    %v81 = vld [vmem:[#allocation5 + $0x58] sm:$0xff]
    %v82 = vld [vmem:[%s2] sm:$0x1]
    %v84 = vperm.slane %v82, 0
    %vm86 = vcmask 785408
    %v88 = vsel %vm86, %v68, 0
    %v91 = vsel %vm86, %v69, 0
    %93 = vmatpush.msra.mxu0 0.0
    %94 = vmatpush.msra.mxu0 0.0
    %95 = vmatpush.msra.mxu0 0.0
    %96 = vmatpush.msra.mxu0 0.0
    %97 = vmatpush.msra.mxu0 %v81
    %98 = vmatpush.msra.mxu0 %v80
    %99 = vmatpush.msra.mxu0 %v79
    %100 = vmatpush.msra.mxu0 %v78
    %101 = vmatpush.msra.mxu0 %v77
    %102 = vmatpush.msra.mxu0 %v76
    %103 = vmatpush.msra.mxu0 %v75
    %104 = vmatpush.msra.mxu0 %v74
    %105 = vmatpush.msra.mxu0 %v73
    %106 = vmatpush.msra.mxu0 %v72
    %107 = vmatpush.msra.mxu0 %v71
    %108 = vmatpush.msra.mxu0 %v70
    %109 = vmatmul.f32.gmra.mxu0 %v88
    %v110 = vpop.f32.mrf.mxu0
    %v111 = vadd.f32 %v84, %v110
    %112 = vmatmul.f32.gmra.mxu0 %v91
    %v113 = vpop.f32.mrf.mxu0
    %v114 = vadd.f32 %v84, %v113
    %115 = vdwg.mxu0
    %v116 = vld [vmem:[#allocation7] sm:$0xff]
    %v117 = vld [vmem:[#allocation7 + $0x8] sm:$0xff]
    %v118 = vld [vmem:[#allocation7 + $0x10] sm:$0xff]
    %v119 = vld [vmem:[#allocation7 + $0x18] sm:$0xff]
    %121 = vrot.lane.b32.xlu0 %v111, 96
    %v122 = vpop.permute.xlu0 %121
    %vm123 = vcmask 64512
    %v124 = vsel %vm123, %v111, 0
    %v126 = vsel %vm123, %v122, 0
    %128 = vmatpush.xpose.msra.mxu0 0.0
    %129 = vmatpush.xpose.msra.mxu0 0.0
    %130 = vmatpush.xpose.msra.mxu0 0.0
    %131 = vmatpush.xpose.msra.mxu0 0.0
    %132 = vmatpush.xpose.msra.mxu0 0.0
    %133 = vmatpush.xpose.msra.mxu0 0.0
    %134 = vmatpush.xpose.msra.mxu0 0.0
    %135 = vmatpush.xpose.msra.mxu0 0.0
    %136 = vmatpush.xpose.msra.mxu0 0.0
    %137 = vmatpush.xpose.msra.mxu0 0.0
    %138 = vmatpush.xpose.msra.mxu0 0.0
    %139 = vmatpush.xpose.msra.mxu0 0.0
    %140 = vmatpush.xpose.msra.mxu0 0.0
    %141 = vmatpush.xpose.msra.mxu0 0.0
    %142 = vmatpush.xpose.msra.mxu0 0.0
    %143 = vmatpush.xpose.msra.mxu0 %v126
    %144 = vmatmul.f32.gmra.mxu0 %v124
    %v145 = vpop.f32.mrf.mxu0
    %v146 = vadd.f32 0.0, %v145
    %147 = vdwg.mxu0
    %149 = vrot.lane.b32.xlu0 %v114, 96
    %v150 = vpop.permute.xlu0 %149
    %v151 = vsel %vm123, %v114, 0
    %v153 = vsel %vm123, %v150, 0
    %155 = vmatpush.xpose.msra.mxu0 0.0
    %156 = vmatpush.xpose.msra.mxu0 0.0
    %157 = vmatpush.xpose.msra.mxu0 0.0
    %158 = vmatpush.xpose.msra.mxu0 0.0
    %159 = vmatpush.xpose.msra.mxu0 0.0
    %160 = vmatpush.xpose.msra.mxu0 0.0
    %161 = vmatpush.xpose.msra.mxu0 0.0
    %162 = vmatpush.xpose.msra.mxu0 0.0
    %163 = vmatpush.xpose.msra.mxu0 0.0
    %164 = vmatpush.xpose.msra.mxu0 0.0
    %165 = vmatpush.xpose.msra.mxu0 0.0
    %166 = vmatpush.xpose.msra.mxu0 0.0
    %167 = vmatpush.xpose.msra.mxu0 0.0
    %168 = vmatpush.xpose.msra.mxu0 0.0
    %169 = vmatpush.xpose.msra.mxu0 0.0
    %170 = vmatpush.xpose.msra.mxu0 %v153
    %171 = vmatmul.f32.gmra.mxu0 %v151
    %v172 = vpop.f32.mrf.mxu0
    %v173 = vadd.f32 0.0, %v172
    %174 = vdwg.mxu0
    %v175 = vmul.f32 %v146, 0.35355338
    %v176 = vmul.f32 %v173, 0.35355338
    %v177 = vsel %vm123, %v175, -inf
    %178 = vmax.xlane.f32.xlu0 %v177
    %v179 = vpop.xlane.xlu0 %178
    %v180 = vsel %vm123, %v176, -inf
    %181 = vmax.xlane.f32.xlu0 %v180
    %v182 = vpop.xlane.xlu0 %181
    %v183 = vsub.f32 %v175, %v179
    %v184 = vsub.f32 %v176, %v182
    %v185 = vmul.f32 %v183, 1.442695
    %v186 = vpow.pop %v185
    %v187 = vmul.f32 %v184, 1.442695
    %v188 = vpow.pop %v187
    %v189 = vsel %vm123, %v186, 0.0
    %190 = vadd.xlane.f32.xlu0 %v189
    %v191 = vpop.xlane.xlu0 %190
    %v192 = vsel %vm123, %v188, 0.0
    %193 = vadd.xlane.f32.xlu0 %v192
    %v194 = vpop.xlane.xlu0 %193
    %v195 = vrcp.pop %v191
    %v196 = vrcp.pop %v194
    %v197 = vmul.f32 %v186, %v195
    %v198 = vmul.f32 %v188, %v196
    %199 = vrot.lane.b32.xlu0 %v111, 64
    %v200 = vpop.permute.xlu0 %199
    %v203 = vsel %vm123, %v197, 0
    %205 = vmatpush.msra.mxu0 0.0
    %206 = vmatpush.msra.mxu0 0.0
    %207 = vmatpush.msra.mxu0 0.0
    %208 = vmatpush.msra.mxu0 0.0
    %209 = vmatpush.msra.mxu0 0.0
    %210 = vmatpush.msra.mxu0 0.0
    %211 = vmatpush.msra.mxu0 0.0
    %212 = vmatpush.msra.mxu0 0.0
    %213 = vmatpush.msra.mxu0 0.0
    %214 = vmatpush.msra.mxu0 0.0
    %215 = vmatpush.msra.mxu0 0.0
    %216 = vmatpush.msra.mxu0 0.0
    %217 = vmatpush.msra.mxu0 0.0
    %218 = vmatpush.msra.mxu0 0.0
    %219 = vmatpush.msra.mxu0 0.0
    %220 = vmatpush.msra.mxu0 %v200
    %221 = vmatmul.f32.gmra.mxu0 %v203
    %v222 = vpop.f32.mrf.mxu0
    %v223 = vadd.f32 0.0, %v222
    %224 = vdwg.mxu0
    %225 = vrot.lane.b32.xlu0 %v114, 64
    %v226 = vpop.permute.xlu0 %225
    %v229 = vsel %vm123, %v198, 0
    %231 = vmatpush.msra.mxu0 0.0
    %232 = vmatpush.msra.mxu0 0.0
    %233 = vmatpush.msra.mxu0 0.0
    %234 = vmatpush.msra.mxu0 0.0
    %235 = vmatpush.msra.mxu0 0.0
    %236 = vmatpush.msra.mxu0 0.0
    %237 = vmatpush.msra.mxu0 0.0
    %238 = vmatpush.msra.mxu0 0.0
    %239 = vmatpush.msra.mxu0 0.0
    %240 = vmatpush.msra.mxu0 0.0
    %241 = vmatpush.msra.mxu0 0.0
    %242 = vmatpush.msra.mxu0 0.0
    %243 = vmatpush.msra.mxu0 0.0
    %244 = vmatpush.msra.mxu0 0.0
    %245 = vmatpush.msra.mxu0 0.0
    %246 = vmatpush.msra.mxu0 %v226
    %247 = vmatmul.f32.gmra.mxu0 %v229
    %v248 = vpop.f32.mrf.mxu0
    %v249 = vadd.f32 0.0, %v248
    %250 = vdwg.mxu0
    %251 = vrot.lane.b32.xlu0 %v111, 120
    %v252 = vpop.permute.xlu0 %251
    %253 = vrot.lane.b32.xlu0 %v111, 88
    %v254 = vpop.permute.xlu0 %253
    %v255 = vsel %vm123, %v252, 0
    %v257 = vsel %vm123, %v254, 0
    %259 = vmatpush.xpose.msra.mxu0 0.0
    %260 = vmatpush.xpose.msra.mxu0 0.0
    %261 = vmatpush.xpose.msra.mxu0 0.0
    %262 = vmatpush.xpose.msra.mxu0 0.0
    %263 = vmatpush.xpose.msra.mxu0 0.0
    %264 = vmatpush.xpose.msra.mxu0 0.0
    %265 = vmatpush.xpose.msra.mxu0 0.0
    %266 = vmatpush.xpose.msra.mxu0 0.0
    %267 = vmatpush.xpose.msra.mxu0 0.0
    %268 = vmatpush.xpose.msra.mxu0 0.0
    %269 = vmatpush.xpose.msra.mxu0 0.0
    %270 = vmatpush.xpose.msra.mxu0 0.0
    %271 = vmatpush.xpose.msra.mxu0 0.0
    %272 = vmatpush.xpose.msra.mxu0 0.0
    %273 = vmatpush.xpose.msra.mxu0 0.0
    %274 = vmatpush.xpose.msra.mxu0 %v257
    %275 = vmatmul.f32.gmra.mxu0 %v255
    %v276 = vpop.f32.mrf.mxu0
    %v277 = vadd.f32 0.0, %v276
    %278 = vdwg.mxu0
    %279 = vrot.lane.b32.xlu0 %v114, 120
    %v280 = vpop.permute.xlu0 %279
    %281 = vrot.lane.b32.xlu0 %v114, 88
    %v282 = vpop.permute.xlu0 %281
    %v283 = vsel %vm123, %v280, 0
    %v285 = vsel %vm123, %v282, 0
    %287 = vmatpush.xpose.msra.mxu0 0.0
    %288 = vmatpush.xpose.msra.mxu0 0.0
    %289 = vmatpush.xpose.msra.mxu0 0.0
    %290 = vmatpush.xpose.msra.mxu0 0.0
    %291 = vmatpush.xpose.msra.mxu0 0.0
    %292 = vmatpush.xpose.msra.mxu0 0.0
    %293 = vmatpush.xpose.msra.mxu0 0.0
    %294 = vmatpush.xpose.msra.mxu0 0.0
    %295 = vmatpush.xpose.msra.mxu0 0.0
    %296 = vmatpush.xpose.msra.mxu0 0.0
    %297 = vmatpush.xpose.msra.mxu0 0.0
    %298 = vmatpush.xpose.msra.mxu0 0.0
    %299 = vmatpush.xpose.msra.mxu0 0.0
    %300 = vmatpush.xpose.msra.mxu0 0.0
    %301 = vmatpush.xpose.msra.mxu0 0.0
    %302 = vmatpush.xpose.msra.mxu0 %v285
    %303 = vmatmul.f32.gmra.mxu0 %v283
    %v304 = vpop.f32.mrf.mxu0
    %v305 = vadd.f32 0.0, %v304
    %306 = vdwg.mxu0
    %v307 = vmul.f32 %v277, 0.35355338
    %v308 = vmul.f32 %v305, 0.35355338
    %v309 = vsel %vm123, %v307, -inf
    %310 = vmax.xlane.f32.xlu0 %v309
    %v311 = vpop.xlane.xlu0 %310
    %v312 = vsel %vm123, %v308, -inf
    %313 = vmax.xlane.f32.xlu0 %v312
    %v314 = vpop.xlane.xlu0 %313
    %v315 = vsub.f32 %v307, %v311
    %v316 = vsub.f32 %v308, %v314
    %v317 = vmul.f32 %v315, 1.442695
    %v318 = vpow.pop %v317
    %v319 = vmul.f32 %v316, 1.442695
    %v320 = vpow.pop %v319
    %v321 = vsel %vm123, %v318, 0.0
    %322 = vadd.xlane.f32.xlu0 %v321
    %v323 = vpop.xlane.xlu0 %322
    %v324 = vsel %vm123, %v320, 0.0
    %325 = vadd.xlane.f32.xlu0 %v324
    %v326 = vpop.xlane.xlu0 %325
    %v327 = vrcp.pop %v323
    %v328 = vrcp.pop %v326
    %v329 = vmul.f32 %v318, %v327
    %v330 = vmul.f32 %v320, %v328
    %331 = vrot.lane.b32.xlu0 %v111, 56
    %v332 = vpop.permute.xlu0 %331
    %v335 = vsel %vm123, %v329, 0
    %337 = vmatpush.msra.mxu0 0.0
    %338 = vmatpush.msra.mxu0 0.0
    %339 = vmatpush.msra.mxu0 0.0
    %340 = vmatpush.msra.mxu0 0.0
    %341 = vmatpush.msra.mxu0 0.0
    %342 = vmatpush.msra.mxu0 0.0
    %343 = vmatpush.msra.mxu0 0.0
    %344 = vmatpush.msra.mxu0 0.0
    %345 = vmatpush.msra.mxu0 0.0
    %346 = vmatpush.msra.mxu0 0.0
    %347 = vmatpush.msra.mxu0 0.0
    %348 = vmatpush.msra.mxu0 0.0
    %349 = vmatpush.msra.mxu0 0.0
    %350 = vmatpush.msra.mxu0 0.0
    %351 = vmatpush.msra.mxu0 0.0
    %352 = vmatpush.msra.mxu0 %v332
    %353 = vmatmul.f32.gmra.mxu0 %v335
    %v354 = vpop.f32.mrf.mxu0
    %v355 = vadd.f32 0.0, %v354
    %356 = vdwg.mxu0
    %357 = vrot.lane.b32.xlu0 %v114, 56
    %v358 = vpop.permute.xlu0 %357
    %v361 = vsel %vm123, %v330, 0
    %363 = vmatpush.msra.mxu0 0.0
    %364 = vmatpush.msra.mxu0 0.0
    %365 = vmatpush.msra.mxu0 0.0
    %366 = vmatpush.msra.mxu0 0.0
    %367 = vmatpush.msra.mxu0 0.0
    %368 = vmatpush.msra.mxu0 0.0
    %369 = vmatpush.msra.mxu0 0.0
    %370 = vmatpush.msra.mxu0 0.0
    %371 = vmatpush.msra.mxu0 0.0
    %372 = vmatpush.msra.mxu0 0.0
    %373 = vmatpush.msra.mxu0 0.0
    %374 = vmatpush.msra.mxu0 0.0
    %375 = vmatpush.msra.mxu0 0.0
    %376 = vmatpush.msra.mxu0 0.0
    %377 = vmatpush.msra.mxu0 0.0
    %378 = vmatpush.msra.mxu0 %v358
    %379 = vmatmul.f32.gmra.mxu0 %v361
    %v380 = vpop.f32.mrf.mxu0
    %v381 = vadd.f32 0.0, %v380
    %382 = vdwg.mxu0
    %v384 = vsel %vm123, %v355, 0
    %v387 = vsel %vm123, %v381, 0
    %389 = vmatpush.msra.mxu0 0.0
    %390 = vmatpush.msra.mxu0 0.0
    %391 = vmatpush.msra.mxu0 0.0
    %392 = vmatpush.msra.mxu0 0.0
    %393 = vmatpush.msra.mxu0 0.0
    %394 = vmatpush.msra.mxu0 0.0
    %395 = vmatpush.msra.mxu0 0.0
    %396 = vmatpush.msra.mxu0 0.0
    %397 = vmatpush.msra.mxu0 0.0
    %398 = vmatpush.msra.mxu0 0.0
    %399 = vmatpush.msra.mxu0 0.0
    %400 = vmatpush.msra.mxu0 0.0
    %401 = vmatpush.msra.mxu0 0.0
    %402 = vmatpush.msra.mxu0 0.0
    %403 = vmatpush.msra.mxu0 0.0
    %404 = vmatpush.msra.mxu0 %v117
    %405 = vmatmul.f32.gmra.mxu0 %v384
    %v406 = vpop.f32.mrf.mxu0
    %v407 = vadd.f32 0.0, %v406
    %408 = vmatmul.f32.gmra.mxu0 %v387
    %v409 = vpop.f32.mrf.mxu0
    %v410 = vadd.f32 0.0, %v409
    %411 = vdwg.mxu0
    %v413 = vsel %vm123, %v223, 0
    %v416 = vsel %vm123, %v249, 0
    %418 = vmatpush.msra.mxu0 0.0
    %419 = vmatpush.msra.mxu0 0.0
    %420 = vmatpush.msra.mxu0 0.0
    %421 = vmatpush.msra.mxu0 0.0
    %422 = vmatpush.msra.mxu0 0.0
    %423 = vmatpush.msra.mxu0 0.0
    %424 = vmatpush.msra.mxu0 0.0
    %425 = vmatpush.msra.mxu0 0.0
    %426 = vmatpush.msra.mxu0 0.0
    %427 = vmatpush.msra.mxu0 0.0
    %428 = vmatpush.msra.mxu0 0.0
    %429 = vmatpush.msra.mxu0 0.0
    %430 = vmatpush.msra.mxu0 0.0
    %431 = vmatpush.msra.mxu0 0.0
    %432 = vmatpush.msra.mxu0 0.0
    %433 = vmatpush.msra.mxu0 %v116
    %434 = vmatmul.f32.gmra.mxu0 %v413
    %v435 = vpop.f32.mrf.mxu0
    %v436 = vadd.f32 %v407, %v435
    %437 = vmatmul.f32.gmra.mxu0 %v416
    %v438 = vpop.f32.mrf.mxu0
    %v439 = vadd.f32 %v410, %v438
    %440 = vdwg.mxu0
    %441 = vrot.lane.b32.xlu0 %v111, 112
    %v442 = vpop.permute.xlu0 %441
    %443 = vrot.lane.b32.xlu0 %v111, 80
    %v444 = vpop.permute.xlu0 %443
    %v445 = vsel %vm123, %v442, 0
    %v447 = vsel %vm123, %v444, 0
    %449 = vmatpush.xpose.msra.mxu0 0.0
    %450 = vmatpush.xpose.msra.mxu0 0.0
    %451 = vmatpush.xpose.msra.mxu0 0.0
    %452 = vmatpush.xpose.msra.mxu0 0.0
    %453 = vmatpush.xpose.msra.mxu0 0.0
    %454 = vmatpush.xpose.msra.mxu0 0.0
    %455 = vmatpush.xpose.msra.mxu0 0.0
    %456 = vmatpush.xpose.msra.mxu0 0.0
    %457 = vmatpush.xpose.msra.mxu0 0.0
    %458 = vmatpush.xpose.msra.mxu0 0.0
    %459 = vmatpush.xpose.msra.mxu0 0.0
    %460 = vmatpush.xpose.msra.mxu0 0.0
    %461 = vmatpush.xpose.msra.mxu0 0.0
    %462 = vmatpush.xpose.msra.mxu0 0.0
    %463 = vmatpush.xpose.msra.mxu0 0.0
    %464 = vmatpush.xpose.msra.mxu0 %v447
    %465 = vmatmul.f32.gmra.mxu0 %v445
    %v466 = vpop.f32.mrf.mxu0
    %v467 = vadd.f32 0.0, %v466
    %468 = vdwg.mxu0
    %469 = vrot.lane.b32.xlu0 %v114, 112
    %v470 = vpop.permute.xlu0 %469
    %471 = vrot.lane.b32.xlu0 %v114, 80
    %v472 = vpop.permute.xlu0 %471
    %v473 = vsel %vm123, %v470, 0
    %v475 = vsel %vm123, %v472, 0
    %477 = vmatpush.xpose.msra.mxu0 0.0
    %478 = vmatpush.xpose.msra.mxu0 0.0
    %479 = vmatpush.xpose.msra.mxu0 0.0
    %480 = vmatpush.xpose.msra.mxu0 0.0
    %481 = vmatpush.xpose.msra.mxu0 0.0
    %482 = vmatpush.xpose.msra.mxu0 0.0
    %483 = vmatpush.xpose.msra.mxu0 0.0
    %484 = vmatpush.xpose.msra.mxu0 0.0
    %485 = vmatpush.xpose.msra.mxu0 0.0
    %486 = vmatpush.xpose.msra.mxu0 0.0
    %487 = vmatpush.xpose.msra.mxu0 0.0
    %488 = vmatpush.xpose.msra.mxu0 0.0
    %489 = vmatpush.xpose.msra.mxu0 0.0
    %490 = vmatpush.xpose.msra.mxu0 0.0
    %491 = vmatpush.xpose.msra.mxu0 0.0
    %492 = vmatpush.xpose.msra.mxu0 %v475
    %493 = vmatmul.f32.gmra.mxu0 %v473
    %v494 = vpop.f32.mrf.mxu0
    %v495 = vadd.f32 0.0, %v494
    %496 = vdwg.mxu0
    %v497 = vmul.f32 %v467, 0.35355338
    %v498 = vmul.f32 %v495, 0.35355338
    %v499 = vsel %vm123, %v497, -inf
    %500 = vmax.xlane.f32.xlu0 %v499
    %v501 = vpop.xlane.xlu0 %500
    %v502 = vsel %vm123, %v498, -inf
    %503 = vmax.xlane.f32.xlu0 %v502
    %v504 = vpop.xlane.xlu0 %503
    %v505 = vsub.f32 %v497, %v501
    %v506 = vsub.f32 %v498, %v504
    %v507 = vmul.f32 %v505, 1.442695
    %v508 = vpow.pop %v507
    %v509 = vmul.f32 %v506, 1.442695
    %v510 = vpow.pop %v509
    %v511 = vsel %vm123, %v508, 0.0
    %512 = vadd.xlane.f32.xlu0 %v511
    %v513 = vpop.xlane.xlu0 %512
    %v514 = vsel %vm123, %v510, 0.0
    %515 = vadd.xlane.f32.xlu0 %v514
    %v516 = vpop.xlane.xlu0 %515
    %v517 = vrcp.pop %v513
    %v518 = vrcp.pop %v516
    %v519 = vmul.f32 %v508, %v517
    %v520 = vmul.f32 %v510, %v518
    %521 = vrot.lane.b32.xlu0 %v111, 48
    %v522 = vpop.permute.xlu0 %521
    %v525 = vsel %vm123, %v519, 0
    %527 = vmatpush.msra.mxu0 0.0
    %528 = vmatpush.msra.mxu0 0.0
    %529 = vmatpush.msra.mxu0 0.0
    %530 = vmatpush.msra.mxu0 0.0
    %531 = vmatpush.msra.mxu0 0.0
    %532 = vmatpush.msra.mxu0 0.0
    %533 = vmatpush.msra.mxu0 0.0
    %534 = vmatpush.msra.mxu0 0.0
    %535 = vmatpush.msra.mxu0 0.0
    %536 = vmatpush.msra.mxu0 0.0
    %537 = vmatpush.msra.mxu0 0.0
    %538 = vmatpush.msra.mxu0 0.0
    %539 = vmatpush.msra.mxu0 0.0
    %540 = vmatpush.msra.mxu0 0.0
    %541 = vmatpush.msra.mxu0 0.0
    %542 = vmatpush.msra.mxu0 %v522
    %543 = vmatmul.f32.gmra.mxu0 %v525
    %v544 = vpop.f32.mrf.mxu0
    %v545 = vadd.f32 0.0, %v544
    %546 = vdwg.mxu0
    %547 = vrot.lane.b32.xlu0 %v114, 48
    %v548 = vpop.permute.xlu0 %547
    %v551 = vsel %vm123, %v520, 0
    %553 = vmatpush.msra.mxu0 0.0
    %554 = vmatpush.msra.mxu0 0.0
    %555 = vmatpush.msra.mxu0 0.0
    %556 = vmatpush.msra.mxu0 0.0
    %557 = vmatpush.msra.mxu0 0.0
    %558 = vmatpush.msra.mxu0 0.0
    %559 = vmatpush.msra.mxu0 0.0
    %560 = vmatpush.msra.mxu0 0.0
    %561 = vmatpush.msra.mxu0 0.0
    %562 = vmatpush.msra.mxu0 0.0
    %563 = vmatpush.msra.mxu0 0.0
    %564 = vmatpush.msra.mxu0 0.0
    %565 = vmatpush.msra.mxu0 0.0
    %566 = vmatpush.msra.mxu0 0.0
    %567 = vmatpush.msra.mxu0 0.0
    %568 = vmatpush.msra.mxu0 %v548
    %569 = vmatmul.f32.gmra.mxu0 %v551
    %v570 = vpop.f32.mrf.mxu0
    %v571 = vadd.f32 0.0, %v570
    %572 = vdwg.mxu0
    %v574 = vsel %vm123, %v545, 0
    %v577 = vsel %vm123, %v571, 0
    %579 = vmatpush.msra.mxu0 0.0
    %580 = vmatpush.msra.mxu0 0.0
    %581 = vmatpush.msra.mxu0 0.0
    %582 = vmatpush.msra.mxu0 0.0
    %583 = vmatpush.msra.mxu0 0.0
    %584 = vmatpush.msra.mxu0 0.0
    %585 = vmatpush.msra.mxu0 0.0
    %586 = vmatpush.msra.mxu0 0.0
    %587 = vmatpush.msra.mxu0 0.0
    %588 = vmatpush.msra.mxu0 0.0
    %589 = vmatpush.msra.mxu0 0.0
    %590 = vmatpush.msra.mxu0 0.0
    %591 = vmatpush.msra.mxu0 0.0
    %592 = vmatpush.msra.mxu0 0.0
    %593 = vmatpush.msra.mxu0 0.0
    %594 = vmatpush.msra.mxu0 %v118
    %595 = vmatmul.f32.gmra.mxu0 %v574
    %v596 = vpop.f32.mrf.mxu0
    %v597 = vadd.f32 0.0, %v596
    %598 = vmatmul.f32.gmra.mxu0 %v577
    %v599 = vpop.f32.mrf.mxu0
    %v600 = vadd.f32 0.0, %v599
    %601 = vdwg.mxu0
    %v602 = vadd.f32 %v436, %v597
    %v603 = vadd.f32 %v439, %v600
    %604 = vrot.lane.b32.xlu0 %v111, 104
    %v605 = vpop.permute.xlu0 %604
    %606 = vrot.lane.b32.xlu0 %v111, 72
    %v607 = vpop.permute.xlu0 %606
    %v608 = vsel %vm123, %v605, 0
    %v610 = vsel %vm123, %v607, 0
    %612 = vmatpush.xpose.msra.mxu0 0.0
    %613 = vmatpush.xpose.msra.mxu0 0.0
    %614 = vmatpush.xpose.msra.mxu0 0.0
    %615 = vmatpush.xpose.msra.mxu0 0.0
    %616 = vmatpush.xpose.msra.mxu0 0.0
    %617 = vmatpush.xpose.msra.mxu0 0.0
    %618 = vmatpush.xpose.msra.mxu0 0.0
    %619 = vmatpush.xpose.msra.mxu0 0.0
    %620 = vmatpush.xpose.msra.mxu0 0.0
    %621 = vmatpush.xpose.msra.mxu0 0.0
    %622 = vmatpush.xpose.msra.mxu0 0.0
    %623 = vmatpush.xpose.msra.mxu0 0.0
    %624 = vmatpush.xpose.msra.mxu0 0.0
    %625 = vmatpush.xpose.msra.mxu0 0.0
    %626 = vmatpush.xpose.msra.mxu0 0.0
    %627 = vmatpush.xpose.msra.mxu0 %v610
    %628 = vmatmul.f32.gmra.mxu0 %v608
    %v629 = vpop.f32.mrf.mxu0
    %v630 = vadd.f32 0.0, %v629
    %631 = vdwg.mxu0
    %632 = vrot.lane.b32.xlu0 %v114, 104
    %v633 = vpop.permute.xlu0 %632
    %634 = vrot.lane.b32.xlu0 %v114, 72
    %v635 = vpop.permute.xlu0 %634
    %v636 = vsel %vm123, %v633, 0
    %v638 = vsel %vm123, %v635, 0
    %640 = vmatpush.xpose.msra.mxu0 0.0
    %641 = vmatpush.xpose.msra.mxu0 0.0
    %642 = vmatpush.xpose.msra.mxu0 0.0
    %643 = vmatpush.xpose.msra.mxu0 0.0
    %644 = vmatpush.xpose.msra.mxu0 0.0
    %645 = vmatpush.xpose.msra.mxu0 0.0
    %646 = vmatpush.xpose.msra.mxu0 0.0
    %647 = vmatpush.xpose.msra.mxu0 0.0
    %648 = vmatpush.xpose.msra.mxu0 0.0
    %649 = vmatpush.xpose.msra.mxu0 0.0
    %650 = vmatpush.xpose.msra.mxu0 0.0
    %651 = vmatpush.xpose.msra.mxu0 0.0
    %652 = vmatpush.xpose.msra.mxu0 0.0
    %653 = vmatpush.xpose.msra.mxu0 0.0
    %654 = vmatpush.xpose.msra.mxu0 0.0
    %655 = vmatpush.xpose.msra.mxu0 %v638
    %656 = vmatmul.f32.gmra.mxu0 %v636
    %v657 = vpop.f32.mrf.mxu0
    %v658 = vadd.f32 0.0, %v657
    %659 = vdwg.mxu0
    %v660 = vmul.f32 %v630, 0.35355338
    %v661 = vmul.f32 %v658, 0.35355338
    %v662 = vsel %vm123, %v660, -inf
    %663 = vmax.xlane.f32.xlu0 %v662
    %v664 = vpop.xlane.xlu0 %663
    %v665 = vsel %vm123, %v661, -inf
    %666 = vmax.xlane.f32.xlu0 %v665
    %v667 = vpop.xlane.xlu0 %666
    %v668 = vsub.f32 %v660, %v664
    %v669 = vsub.f32 %v661, %v667
    %v670 = vmul.f32 %v668, 1.442695
    %v671 = vpow.pop %v670
    %v672 = vmul.f32 %v669, 1.442695
    %v673 = vpow.pop %v672
    %v674 = vsel %vm123, %v671, 0.0
    %675 = vadd.xlane.f32.xlu0 %v674
    %v676 = vpop.xlane.xlu0 %675
    %v677 = vsel %vm123, %v673, 0.0
    %678 = vadd.xlane.f32.xlu0 %v677
    %v679 = vpop.xlane.xlu0 %678
    %v680 = vrcp.pop %v676
    %v681 = vrcp.pop %v679
    %v682 = vmul.f32 %v671, %v680
    %v683 = vmul.f32 %v673, %v681
    %684 = vrot.lane.b32.xlu0 %v111, 40
    %v685 = vpop.permute.xlu0 %684
    %v688 = vsel %vm123, %v682, 0
    %690 = vmatpush.msra.mxu0 0.0
    %691 = vmatpush.msra.mxu0 0.0
    %692 = vmatpush.msra.mxu0 0.0
    %693 = vmatpush.msra.mxu0 0.0
    %694 = vmatpush.msra.mxu0 0.0
    %695 = vmatpush.msra.mxu0 0.0
    %696 = vmatpush.msra.mxu0 0.0
    %697 = vmatpush.msra.mxu0 0.0
    %698 = vmatpush.msra.mxu0 0.0
    %699 = vmatpush.msra.mxu0 0.0
    %700 = vmatpush.msra.mxu0 0.0
    %701 = vmatpush.msra.mxu0 0.0
    %702 = vmatpush.msra.mxu0 0.0
    %703 = vmatpush.msra.mxu0 0.0
    %704 = vmatpush.msra.mxu0 0.0
    %705 = vmatpush.msra.mxu0 %v685
    %706 = vmatmul.f32.gmra.mxu0 %v688
    %v707 = vpop.f32.mrf.mxu0
    %v708 = vadd.f32 0.0, %v707
    %709 = vdwg.mxu0
    %710 = vrot.lane.b32.xlu0 %v114, 40
    %v711 = vpop.permute.xlu0 %710
    %v714 = vsel %vm123, %v683, 0
    %716 = vmatpush.msra.mxu0 0.0
    %717 = vmatpush.msra.mxu0 0.0
    %718 = vmatpush.msra.mxu0 0.0
    %719 = vmatpush.msra.mxu0 0.0
    %720 = vmatpush.msra.mxu0 0.0
    %721 = vmatpush.msra.mxu0 0.0
    %722 = vmatpush.msra.mxu0 0.0
    %723 = vmatpush.msra.mxu0 0.0
    %724 = vmatpush.msra.mxu0 0.0
    %725 = vmatpush.msra.mxu0 0.0
    %726 = vmatpush.msra.mxu0 0.0
    %727 = vmatpush.msra.mxu0 0.0
    %728 = vmatpush.msra.mxu0 0.0
    %729 = vmatpush.msra.mxu0 0.0
    %730 = vmatpush.msra.mxu0 0.0
    %731 = vmatpush.msra.mxu0 %v711
    %732 = vmatmul.f32.gmra.mxu0 %v714
    %v733 = vpop.f32.mrf.mxu0
    %v734 = vadd.f32 0.0, %v733
    %735 = vdwg.mxu0
    %v737 = vsel %vm123, %v708, 0
    %v740 = vsel %vm123, %v734, 0
    %742 = vmatpush.msra.mxu0 0.0
    %743 = vmatpush.msra.mxu0 0.0
    %744 = vmatpush.msra.mxu0 0.0
    %745 = vmatpush.msra.mxu0 0.0
    %746 = vmatpush.msra.mxu0 0.0
    %747 = vmatpush.msra.mxu0 0.0
    %748 = vmatpush.msra.mxu0 0.0
    %749 = vmatpush.msra.mxu0 0.0
    %750 = vmatpush.msra.mxu0 0.0
    %751 = vmatpush.msra.mxu0 0.0
    %752 = vmatpush.msra.mxu0 0.0
    %753 = vmatpush.msra.mxu0 0.0
    %754 = vmatpush.msra.mxu0 0.0
    %755 = vmatpush.msra.mxu0 0.0
    %756 = vmatpush.msra.mxu0 0.0
    %757 = vmatpush.msra.mxu0 %v119
    %758 = vmatmul.f32.gmra.mxu0 %v737
    %v759 = vpop.f32.mrf.mxu0
    %v760 = vadd.f32 0.0, %v759
    %761 = vmatmul.f32.gmra.mxu0 %v740
    %v762 = vpop.f32.mrf.mxu0
    %v763 = vadd.f32 0.0, %v762
    %764 = vdwg.mxu0
    %v765 = vadd.f32 %v602, %v760
    %v766 = vadd.f32 %v603, %v763
    %v767 = vld [vmem:[%s4] sm:$0x1]
    %v769 = vperm.slane %v767, 0
    %v771 = vadd.f32 %v765, %v769
    %v772 = vadd.f32 %v766, %v769
    %vm773 = vcmask 261120
    %774 = vst.msk [vmem:[#allocation8] sm:$0xff] %vm773, %v771
    %775 = vst.msk [vmem:[#allocation8 + $0x8] sm:$0xff] %vm773, %v772
    // Predicated region
    $region34: #{tpu_custom_call.1} parent=1 // pred_check
      _
    $region35: #{tpu_custom_call.1} parent=1 // pred_check_branch
      %777 = sbr.rel (0) target = $region37
    $region36: #{tpu_custom_call.1} parent=1 // pred_region
      %779 = vsyncadd [#allocation4], 0
      %s780 = sshll.u32 [#allocation8], 4
      %s781 = int_to_ptr.vmem [resolvable:$true] %s780
      %s782 = sshll.u32 %s5, 4
      %s783 = int_to_ptr.hbm [resolvable:$true] %s782
      %788 = dma.vmem_to_hbm [thread:$0]  %s781, 256, %s783, [#allocation4], 128, 128, 8
    $region37: #{tpu_custom_call.1} parent=1 // pred_fallthru
      _
    // Predicated region
    $region38: #{tpu_custom_call.1} parent=1 // pred_check
      _
    $region39: #{tpu_custom_call.1} parent=1 // pred_check_branch
      %790 = sbr.rel (0) target = $region41
    $region40: #{tpu_custom_call.1} parent=1 // pred_region
      %792 = dma.done [#allocation4], 256
    $region41: #{tpu_custom_call.1} parent=1 // pred_fallthru
      _
    %793 = vsyncpa [#allocation3], 1
    %794 = vsyncpa [#allocation6], 1
    %795 = vsyncpa [#allocation4], 1

</llo_original>
